<compile_context>
chip_gen: v5e
topology: v5e:2x2
jax: 0.10.0
libtpu: 0.0.40
codegen_flags: <defaults>
</compile_context>

<pallas_src>
import jax
import jax.numpy as jnp
from jax.experimental import pallas as pl
from jax.experimental.pallas import tpu as pltpu

LANE = 128


def _round_up(x, m):
    return (x + m - 1) // m * m


def qnet_kernel(x_ref, w1_ref, w2_ref, w3_ref, b_ref, o_ref):
    f1 = w1_ref.shape[1]
    f2 = w2_ref.shape[1]
    a = w3_ref.shape[1]

    x = x_ref[...]            # (bm, S) bf16
    b = b_ref[...]            # (3, BW) f32, zero-padded rows: [b1, b2, b3]

    # fc1 + ReLU: bf16 x bf16 operands, f32 MXU accumulation; bias/ReLU in f32.
    h1 = jnp.dot(x, w1_ref[...], preferred_element_type=jnp.float32) + b[0:1, :f1]
    h1 = jnp.maximum(h1, 0.0).astype(jnp.bfloat16)
    # fc2 + ReLU
    h2 = jnp.dot(h1, w2_ref[...], preferred_element_type=jnp.float32) + b[1:2, :f2]
    h2 = jnp.maximum(h2, 0.0).astype(jnp.bfloat16)
    # fc3 (no activation); output block is exactly (bm, A)
    o_ref[...] = (jnp.dot(h2, w3_ref[...], preferred_element_type=jnp.float32)
                  + b[2:3, :a]).astype(o_ref.dtype)


def qnetwork_forward(x, params, *, block_batch=2048, weights_dtype=jnp.bfloat16):
    """Fused forward pass. x: (B, state_size). params: dict w1,b1,w2,b2,w3,b3."""
    w1, b1 = params["w1"], params["b1"]
    w2, b2 = params["w2"], params["b2"]
    w3, b3 = params["w3"], params["b3"]

    B, S = x.shape
    F1 = w1.shape[1]
    F2 = w2.shape[1]
    A = w3.shape[1]

    # --- pack the three tiny biases into one resident buffer (one DMA) ---
    BW = max(_round_up(F1, LANE), _round_up(F2, LANE), _round_up(A, LANE))
    bias = jnp.zeros((3, BW), jnp.float32)
    bias = bias.at[0, :F1].set(b1[0].astype(jnp.float32))
    bias = bias.at[1, :F2].set(b2[0].astype(jnp.float32))
    bias = bias.at[2, :A].set(b3[0].astype(jnp.float32))

    # --- bf16 weights + bf16 activations -> native MXU path, f32 accumulate ---
    w1c = w1.astype(weights_dtype)
    w2c = w2.astype(weights_dtype)
    w3c = w3.astype(weights_dtype)
    xb = x.astype(jnp.bfloat16)

    # --- batch tile: large tiles, but >=2 grid steps when possible (v7x 2 TCs) ---
    if B <= 8:
        bm = B
    else:
        bm = max(8, min(block_batch, _round_up(pl.cdiv(B, 2), 8)))
    Bp = _round_up(B, bm)
    if Bp != B:
        xb = jnp.zeros((Bp, S), xb.dtype).at[:B].set(xb)
    grid = (Bp // bm,)

    flops = 2 * Bp * (S * F1 + F1 * F2 + F2 * A)
    bytes_accessed = int(
        xb.size * xb.dtype.itemsize
        + w1c.size * w1c.dtype.itemsize
        + w2c.size * w2c.dtype.itemsize
        + w3c.size * w3c.dtype.itemsize
        + bias.size * bias.dtype.itemsize
        + Bp * A * 4
    )

    out = pl.pallas_call(
        qnet_kernel,
        out_shape=jax.ShapeDtypeStruct((Bp, A), jnp.float32),
        grid=grid,
        in_specs=[
            pl.BlockSpec((bm, S), lambda i: (i, 0)),    # x: tiled over batch
            pl.BlockSpec((S, F1), lambda i: (0, 0)),    # weights/bias: VMEM-resident
            pl.BlockSpec((F1, F2), lambda i: (0, 0)),
            pl.BlockSpec((F2, A), lambda i: (0, 0)),
            pl.BlockSpec((3, BW), lambda i: (0, 0)),
        ],
        out_specs=pl.BlockSpec((bm, A), lambda i: (i, 0)),
        compiler_params=pltpu.CompilerParams(
            dimension_semantics=("parallel",),   # v7x: shard batch tiles across 2 TCs
        ),
        cost_estimate=pl.CostEstimate(
            flops=flops, transcendentals=0, bytes_accessed=bytes_accessed),
    )(xb, w1c, w2c, w3c, bias)

    return out[:B] if Bp != B else out


def init_params(key, state_size, action_size, fc1_unit=128, fc2_unit=128):
    """Deterministic init mimicking torch.nn.Linear default (U[-1/sqrt(fan_in), +1/sqrt(fan_in)])."""
    ks = jax.random.split(key, 6)

    def linear(kw, kb, fan_in, fan_out):
        bound = 1.0 / jnp.sqrt(jnp.float32(fan_in))
        w = jax.random.uniform(kw, (fan_in, fan_out), jnp.float32, -bound, bound)
        b = jax.random.uniform(kb, (1, fan_out), jnp.float32, -bound, bound)
        return w, b

    w1, b1 = linear(ks[0], ks[1], state_size, fc1_unit)
    w2, b2 = linear(ks[2], ks[3], fc1_unit, fc2_unit)
    w3, b3 = linear(ks[4], ks[5], fc2_unit, action_size)
    return {"w1": w1, "b1": b1, "w2": w2, "b2": b2, "w3": w3, "b3": b3}


if __name__ == "__main__":
    # TODO(synk): torch state_dict save/load + device placement are host-side I/O,
    # not kernel work; only the forward pass is implemented here.
    key = jax.random.PRNGKey(0)
    k_param, k_x = jax.random.split(key)

    batch, state_size, action_size = 8, 8, 4
    params = init_params(k_param, state_size, action_size, fc1_unit=128, fc2_unit=128)
    x = jax.random.normal(k_x, (batch, state_size), jnp.float32)

    out = qnetwork_forward(x, params)
    out = jax.block_until_ready(out)

    # reference mimicking the kernel's numerics: bf16 operands, f32 accumulation
    xb = x.astype(jnp.bfloat16)
    w1b = params["w1"].astype(jnp.bfloat16)
    w2b = params["w2"].astype(jnp.bfloat16)
    w3b = params["w3"].astype(jnp.bfloat16)
    h1 = jnp.maximum(jnp.dot(xb, w1b, preferred_element_type=jnp.float32)
                     + params["b1"], 0.0).astype(jnp.bfloat16)
    h2 = jnp.maximum(jnp.dot(h1, w2b, preferred_element_type=jnp.float32)
                     + params["b2"], 0.0).astype(jnp.bfloat16)
    ref = jnp.dot(h2, w3b, preferred_element_type=jnp.float32) + params["b3"]

    assert out.shape == (batch, action_size)
    err = float(jnp.max(jnp.abs(out - ref)))
    assert jnp.allclose(out, ref, atol=1e-2, rtol=1e-2), err

    print("KERNEL_OK")
</pallas_src>

<mosaic_0001>
module attributes {stable_mosaic.version = 11 : i64} {
  func.func @qnet_kernel(%arg0: i32, %arg1: memref<8x8xbf16, #tpu.memory_space<vmem>>, %arg2: memref<8x128xbf16, #tpu.memory_space<vmem>>, %arg3: memref<128x128xbf16, #tpu.memory_space<vmem>>, %arg4: memref<128x4xbf16, #tpu.memory_space<vmem>>, %arg5: memref<3x128xf32, #tpu.memory_space<vmem>>, %arg6: memref<8x4xf32, #tpu.memory_space<vmem>>) attributes {dimension_semantics = [#tpu.dimension_semantics<parallel>], iteration_bounds = array<i64: 1>, scalar_prefetch = 0 : i64, scratch_operands = 0 : i64, tpu.core_type = #tpu.core_type<tc>, window_params = [{transform_indices = @transform_0, window_bounds = array<i64: 8, 8>}, {pipeline_mode = #tpu.pipeline_mode<synchronous>, transform_indices = @transform_1, window_bounds = array<i64: 8, 128>}, {pipeline_mode = #tpu.pipeline_mode<synchronous>, transform_indices = @transform_2, window_bounds = array<i64: 128, 128>}, {pipeline_mode = #tpu.pipeline_mode<synchronous>, transform_indices = @transform_3, window_bounds = array<i64: 128, 4>}, {pipeline_mode = #tpu.pipeline_mode<synchronous>, transform_indices = @transform_4, window_bounds = array<i64: 3, 128>}, {transform_indices = @transform_5, window_bounds = array<i64: 8, 4>}]} {
    %c0 = arith.constant 0 : index
    %c0_0 = arith.constant 0 : index
    %0 = vector.load %arg1[%c0, %c0_0] : memref<8x8xbf16, #tpu.memory_space<vmem>>, vector<8x8xbf16>
    %c0_1 = arith.constant 0 : index
    %c0_2 = arith.constant 0 : index
    %1 = vector.load %arg5[%c0_1, %c0_2] : memref<3x128xf32, #tpu.memory_space<vmem>>, vector<3x128xf32>
    %c0_3 = arith.constant 0 : index
    %c0_4 = arith.constant 0 : index
    %2 = vector.load %arg2[%c0_3, %c0_4] : memref<8x128xbf16, #tpu.memory_space<vmem>>, vector<8x128xbf16>
    %cst = arith.constant dense<0.000000e+00> : vector<8x128xf32>
    %3 = tpu.matmul %0, %2, %cst {dimension_numbers = #tpu.dot_dimension_numbers<[1], [0], [0], [1], [0, 0, 1, 1], [], []>} : vector<8x8xbf16>, vector<8x128xbf16>, vector<8x128xf32> -> vector<8x128xf32>
    %4 = vector.extract_strided_slice %1 {offsets = [0, 0], sizes = [1, 128], strides = [1, 1]} : vector<3x128xf32> to vector<1x128xf32>
    %5 = vector.broadcast %4 : vector<1x128xf32> to vector<8x128xf32>
    %6 = arith.addf %3, %5 : vector<8x128xf32>
    %cst_5 = arith.constant 0.000000e+00 : f32
    %7 = vector.broadcast %cst_5 : f32 to vector<8x128xf32>
    %8 = arith.maximumf %6, %7 : vector<8x128xf32>
    %9 = arith.truncf %8 : vector<8x128xf32> to vector<8x128xbf16>
    %c0_6 = arith.constant 0 : index
    %c0_7 = arith.constant 0 : index
    %10 = vector.load %arg3[%c0_6, %c0_7] : memref<128x128xbf16, #tpu.memory_space<vmem>>, vector<128x128xbf16>
    %cst_8 = arith.constant dense<0.000000e+00> : vector<8x128xf32>
    %11 = tpu.matmul %9, %10, %cst_8 {dimension_numbers = #tpu.dot_dimension_numbers<[1], [0], [0], [1], [0, 0, 1, 1], [], []>} : vector<8x128xbf16>, vector<128x128xbf16>, vector<8x128xf32> -> vector<8x128xf32>
    %12 = vector.extract_strided_slice %1 {offsets = [1, 0], sizes = [1, 128], strides = [1, 1]} : vector<3x128xf32> to vector<1x128xf32>
    %13 = vector.broadcast %12 : vector<1x128xf32> to vector<8x128xf32>
    %14 = arith.addf %11, %13 : vector<8x128xf32>
    %cst_9 = arith.constant 0.000000e+00 : f32
    %15 = vector.broadcast %cst_9 : f32 to vector<8x128xf32>
    %16 = arith.maximumf %14, %15 : vector<8x128xf32>
    %17 = arith.truncf %16 : vector<8x128xf32> to vector<8x128xbf16>
    %c0_10 = arith.constant 0 : index
    %c0_11 = arith.constant 0 : index
    %18 = vector.load %arg4[%c0_10, %c0_11] : memref<128x4xbf16, #tpu.memory_space<vmem>>, vector<128x4xbf16>
    %cst_12 = arith.constant dense<0.000000e+00> : vector<8x4xf32>
    %19 = tpu.matmul %17, %18, %cst_12 {dimension_numbers = #tpu.dot_dimension_numbers<[1], [0], [0], [1], [0, 0, 1, 1], [], []>} : vector<8x128xbf16>, vector<128x4xbf16>, vector<8x4xf32> -> vector<8x4xf32>
    %20 = vector.extract_strided_slice %1 {offsets = [2, 0], sizes = [1, 4], strides = [1, 1]} : vector<3x128xf32> to vector<1x4xf32>
    %21 = vector.broadcast %20 : vector<1x4xf32> to vector<8x4xf32>
    %22 = arith.addf %19, %21 : vector<8x4xf32>
    %c0_13 = arith.constant 0 : index
    %c0_14 = arith.constant 0 : index
    %23 = vector.load %arg6[%c0_13, %c0_14] : memref<8x4xf32, #tpu.memory_space<vmem>>, vector<8x4xf32>
    tpu.vector_store %arg6[%c0_13, %c0_14], %22 {strides = array<i32>} : memref<8x4xf32, #tpu.memory_space<vmem>>, vector<8x4xf32>,
    return
  }
  func.func @transform_0(%arg0: i32) -> (i32, i32) {
    %c0_i32 = arith.constant 0 : i32
    %c0_i32_0 = arith.constant 0 : i32
    return %arg0, %c0_i32 : i32, i32
  }
  func.func @transform_1(%arg0: i32) -> (i32, i32) {
    %c0_i32 = arith.constant 0 : i32
    %c0_i32_0 = arith.constant 0 : i32
    %c0_i32_1 = arith.constant 0 : i32
    return %c0_i32, %c0_i32_0 : i32, i32
  }
  func.func @transform_2(%arg0: i32) -> (i32, i32) {
    %c0_i32 = arith.constant 0 : i32
    %c0_i32_0 = arith.constant 0 : i32
    %c0_i32_1 = arith.constant 0 : i32
    return %c0_i32, %c0_i32_0 : i32, i32
  }
  func.func @transform_3(%arg0: i32) -> (i32, i32) {
    %c0_i32 = arith.constant 0 : i32
    %c0_i32_0 = arith.constant 0 : i32
    %c0_i32_1 = arith.constant 0 : i32
    return %c0_i32, %c0_i32_0 : i32, i32
  }
  func.func @transform_4(%arg0: i32) -> (i32, i32) {
    %c0_i32 = arith.constant 0 : i32
    %c0_i32_0 = arith.constant 0 : i32
    %c0_i32_1 = arith.constant 0 : i32
    return %c0_i32, %c0_i32_0 : i32, i32
  }
  func.func @transform_5(%arg0: i32) -> (i32, i32) {
    %c0_i32 = arith.constant 0 : i32
    %c0_i32_0 = arith.constant 0 : i32
    return %arg0, %c0_i32 : i32, i32
  }
}

</mosaic_0001>

<llo_original>
// kernel: tpu_custom_call.1
$region0: #{tpu_custom_call.1}
  #allocation0 [shape = 'u32[]', space=smem, size = 0x4, offset = 0x4, fixed_abs, tag = 'smem constant byte address 0x4 - core index']
  #allocation1 [shape = 'u32[72,128]{1,0:T(1,128)}', space=vmem, size = 0x9000, scoped, tag = 'internal scratch']
  %s0 = inlined_call_operand.hbm [shape: bf16[8,8], index: 0, kind: input, shape index: {}]
  %s1 = inlined_call_operand.hbm [shape: bf16[8,128], index: 1, kind: input, shape index: {}]
  %s2 = inlined_call_operand.vmem [shape: bf16[128,128], index: 2, kind: input, shape index: {}]
  %s3 = inlined_call_operand.vmem [shape: bf16[128,4], index: 3, kind: input, shape index: {}]
  %s4 = inlined_call_operand.vmem [shape: f32[3,128], index: 4, kind: input, shape index: {}]
  %s5 = inlined_call_operand.vmem [shape: f32[8,4], index: 5, kind: output, shape index: {}]
  %s6 = sld [smem:[#allocation0]]
  $region38: #{tpu_custom_call.1} parent=0
    _
  %s8 = ssub.s32 1, %s6
  %s9 = scalar_select 0, %s8, %s6
  $region1: #{tpu_custom_call.1} parent=0
    #allocation2 [shape = 'u8[2048]{0}', space=vmem, size = 0x800, scoped, tag = 'input window, operand 0, single buffered']
    #allocation3 [shape = 's32[1]{0}', space=sflag, size = 0x4, scoped, tag = 'scoped memory for tpu_custom_call.1']
    #allocation4 [shape = 'u8[2048]{0}', space=vmem, size = 0x800, scoped, tag = 'input window, operand 1, single buffered']
    #allocation5 [shape = 's32[1]{0}', space=sflag, size = 0x4, scoped, tag = 'scoped memory for tpu_custom_call.1']
    %10 = vsyncpa [#allocation3], 0
    %11 = vsyncpa [#allocation5], 0
    // Predicated region
    $region2: #{tpu_custom_call.1} parent=1 // pred_check
      _
    $region3: #{tpu_custom_call.1} parent=1 // pred_check_branch
      %13 = sbr.rel (0) target = $region5
    $region4: #{tpu_custom_call.1} parent=1 // pred_region
      %15 = vsyncadd [#allocation3], 0
      %s17 = sshll.u32 %s0, 4
      %s18 = int_to_ptr.hbm [resolvable:$true] %s17
      %s19 = sshll.u32 [#allocation2], 4
      %s20 = int_to_ptr.vmem [resolvable:$true] %s19
      %22 = dma.hbm_to_vmem [thread:$0]  %s18, 64, %s20, [#allocation3]
    $region5: #{tpu_custom_call.1} parent=1 // pred_fallthru
      _
    // Predicated region
    $region6: #{tpu_custom_call.1} parent=1 // pred_check
      _
    $region7: #{tpu_custom_call.1} parent=1 // pred_check_branch
      %24 = sbr.rel (0) target = $region9
    $region8: #{tpu_custom_call.1} parent=1 // pred_region
      %26 = vsyncadd [#allocation5], 0
      %s28 = sshll.u32 %s1, 4
      %s29 = int_to_ptr.hbm [resolvable:$true] %s28
      %s30 = sshll.u32 [#allocation4], 4
      %s31 = int_to_ptr.vmem [resolvable:$true] %s30
      %33 = dma.hbm_to_vmem [thread:$0]  %s29, 64, %s31, [#allocation5]
    $region9: #{tpu_custom_call.1} parent=1 // pred_fallthru
      _
    // Predicated region
    $region10: #{tpu_custom_call.1} parent=1 // pred_check
      _
    $region11: #{tpu_custom_call.1} parent=1 // pred_check_branch
      %35 = sbr.rel (0) target = $region13
    $region12: #{tpu_custom_call.1} parent=1 // pred_region
      _
    $region13: #{tpu_custom_call.1} parent=1 // pred_fallthru
      _
    // Predicated region
    $region14: #{tpu_custom_call.1} parent=1 // pred_check
      _
    $region15: #{tpu_custom_call.1} parent=1 // pred_check_branch
      %37 = sbr.rel (0) target = $region17
    $region16: #{tpu_custom_call.1} parent=1 // pred_region
      _
    $region17: #{tpu_custom_call.1} parent=1 // pred_fallthru
      _
    // Predicated region
    $region18: #{tpu_custom_call.1} parent=1 // pred_check
      _
    $region19: #{tpu_custom_call.1} parent=1 // pred_check_branch
      %39 = sbr.rel (0) target = $region21
    $region20: #{tpu_custom_call.1} parent=1 // pred_region
      _
    $region21: #{tpu_custom_call.1} parent=1 // pred_fallthru
      _
    // Predicated region
    $region22: #{tpu_custom_call.1} parent=1 // pred_check
      _
    $region23: #{tpu_custom_call.1} parent=1 // pred_check_branch
      %41 = sbr.rel (0) target = $region25
    $region24: #{tpu_custom_call.1} parent=1 // pred_region
      %43 = dma.done [#allocation3], 64
    $region25: #{tpu_custom_call.1} parent=1 // pred_fallthru
      _
    // Predicated region
    $region26: #{tpu_custom_call.1} parent=1 // pred_check
      _
    $region27: #{tpu_custom_call.1} parent=1 // pred_check_branch
      %45 = sbr.rel (0) target = $region29
    $region28: #{tpu_custom_call.1} parent=1 // pred_region
      %47 = dma.done [#allocation5], 64
    $region29: #{tpu_custom_call.1} parent=1 // pred_fallthru
      _
    %v49 = vld [vmem:[#allocation2] sm:$0xf]
    %v50 = vld [vmem:[%s4] sm:$0x7]
    %v51 = vld [vmem:[#allocation4] sm:$0xf]
    %v52 = vperm.slane %v50, 0
    %vm53 = vcmask 64512
    %v55 = vsel %vm53, %v49, 0
    %vm57 = vcmask 1043456
    %v59 = vsel %vm57, %v51, 0
    %61 = vmatpush.bf16.msra.mxu0 0
    %62 = vmatpush.bf16.msra.mxu0 0
    %63 = vmatpush.bf16.msra.mxu0 0
    %64 = vmatpush.bf16.msra.mxu0 0
    %65 = vmatpush.bf16.msra.mxu0 0
    %66 = vmatpush.bf16.msra.mxu0 0
    %67 = vmatpush.bf16.msra.mxu0 0
    %68 = vmatpush.bf16.msra.mxu0 %v59
    %69 = vmatmul.bf16.gmra.mxu0 %v55
    %v70 = vpop.f32.mrf.mxu0
    %v71 = vadd.f32 %v52, %v70
    %v72 = vpop.f32.mrf.mxu0
    %73 = vdwg.mxu0
    %v74 = vmax.f32 %v71, 0.0
    %v75 = vpack.c.bf16 %v74, %v74
    %v76 = vld [vmem:[%s2] sm:$0xf]
    %v77 = vld [vmem:[%s2 + $0x4] sm:$0xf]
    %v78 = vld [vmem:[%s2 + $0x8] sm:$0xf]
    %v79 = vld [vmem:[%s2 + $0xc] sm:$0xf]
    %v80 = vld [vmem:[%s2 + $0x10] sm:$0xf]
    %v81 = vld [vmem:[%s2 + $0x14] sm:$0xf]
    %v82 = vld [vmem:[%s2 + $0x18] sm:$0xf]
    %v83 = vld [vmem:[%s2 + $0x1c] sm:$0xf]
    %v84 = vld [vmem:[%s2 + $0x20] sm:$0xf]
    %v85 = vld [vmem:[%s2 + $0x24] sm:$0xf]
    %v86 = vld [vmem:[%s2 + $0x28] sm:$0xf]
    %v87 = vld [vmem:[%s2 + $0x2c] sm:$0xf]
    %v88 = vld [vmem:[%s2 + $0x30] sm:$0xf]
    %v89 = vld [vmem:[%s2 + $0x34] sm:$0xf]
    %v90 = vld [vmem:[%s2 + $0x38] sm:$0xf]
    %v91 = vld [vmem:[%s2 + $0x3c] sm:$0xf]
    %v92 = vperm.slane %v50, 1
    %v109 = vunpack.c.l.b16 %v76
    %v110 = vunpack.c.l.b16 %v77
    %v111 = vunpack.c.l.b16 %v78
    %v112 = vunpack.c.l.b16 %v79
    %v113 = vunpack.c.l.b16 %v80
    %v114 = vunpack.c.l.b16 %v81
    %v115 = vunpack.c.l.b16 %v82
    %v116 = vunpack.c.l.b16 %v83
    %v117 = vunpack.c.l.b16 %v84
    %v118 = vunpack.c.l.b16 %v85
    %v119 = vunpack.c.l.b16 %v86
    %v120 = vunpack.c.l.b16 %v87
    %v121 = vunpack.c.l.b16 %v88
    %v122 = vunpack.c.l.b16 %v89
    %v123 = vunpack.c.l.b16 %v90
    %v124 = vunpack.c.l.b16 %v91
    %v125 = vpack.c.b16 %v110, %v109
    %v126 = vpack.c.b16 %v112, %v111
    %v127 = vpack.c.b16 %v114, %v113
    %v128 = vpack.c.b16 %v116, %v115
    %v129 = vpack.c.b16 %v118, %v117
    %v130 = vpack.c.b16 %v120, %v119
    %v131 = vpack.c.b16 %v122, %v121
    %v132 = vpack.c.b16 %v124, %v123
    %141 = vmatpush.bf16.msra.mxu0 %v132
    %142 = vmatpush.bf16.msra.mxu0 %v131
    %143 = vmatpush.bf16.msra.mxu0 %v130
    %144 = vmatpush.bf16.msra.mxu0 %v129
    %145 = vmatpush.bf16.msra.mxu0 %v128
    %146 = vmatpush.bf16.msra.mxu0 %v127
    %147 = vmatpush.bf16.msra.mxu0 %v126
    %148 = vmatpush.bf16.msra.mxu0 %v125
    %149 = vmatmul.bf16.gmra.mxu0 %v75
    %v150 = vpop.f32.mrf.mxu0
    %v151 = vadd.f32 %v92, %v150
    %v152 = vpop.f32.mrf.mxu0
    %153 = vdwg.mxu0
    %v154 = vmax.f32 %v151, 0.0
    %v155 = vpack.c.bf16 %v154, %v154
    %v156 = vld [vmem:[%s3] sm:$0xf]
    %v157 = vld [vmem:[%s3 + $0x4] sm:$0xf]
    %v158 = vld [vmem:[%s3 + $0x8] sm:$0xf]
    %v159 = vld [vmem:[%s3 + $0xc] sm:$0xf]
    %v160 = vld [vmem:[%s3 + $0x10] sm:$0xf]
    %v161 = vld [vmem:[%s3 + $0x14] sm:$0xf]
    %v162 = vld [vmem:[%s3 + $0x18] sm:$0xf]
    %v163 = vld [vmem:[%s3 + $0x1c] sm:$0xf]
    %v164 = vld [vmem:[%s3 + $0x20] sm:$0xf]
    %v165 = vld [vmem:[%s3 + $0x24] sm:$0xf]
    %v166 = vld [vmem:[%s3 + $0x28] sm:$0xf]
    %v167 = vld [vmem:[%s3 + $0x2c] sm:$0xf]
    %v168 = vld [vmem:[%s3 + $0x30] sm:$0xf]
    %v169 = vld [vmem:[%s3 + $0x34] sm:$0xf]
    %v170 = vld [vmem:[%s3 + $0x38] sm:$0xf]
    %v171 = vld [vmem:[%s3 + $0x3c] sm:$0xf]
    %v172 = vperm.slane %v50, 2
    %v189 = vunpack.c.l.b16 %v156
    %v190 = vunpack.c.l.b16 %v157
    %v191 = vunpack.c.l.b16 %v158
    %v192 = vunpack.c.l.b16 %v159
    %v193 = vunpack.c.l.b16 %v160
    %v194 = vunpack.c.l.b16 %v161
    %v195 = vunpack.c.l.b16 %v162
    %v196 = vunpack.c.l.b16 %v163
    %v197 = vunpack.c.l.b16 %v164
    %v198 = vunpack.c.l.b16 %v165
    %v199 = vunpack.c.l.b16 %v166
    %v200 = vunpack.c.l.b16 %v167
    %v201 = vunpack.c.l.b16 %v168
    %v202 = vunpack.c.l.b16 %v169
    %v203 = vunpack.c.l.b16 %v170
    %v204 = vunpack.c.l.b16 %v171
    %v205 = vpack.c.b16 %v190, %v189
    %v206 = vpack.c.b16 %v192, %v191
    %v207 = vpack.c.b16 %v194, %v193
    %v208 = vpack.c.b16 %v196, %v195
    %v209 = vpack.c.b16 %v198, %v197
    %v210 = vpack.c.b16 %v200, %v199
    %v211 = vpack.c.b16 %v202, %v201
    %v212 = vpack.c.b16 %v204, %v203
    %221 = vmatpush.bf16.msra.mxu0 %v212
    %222 = vmatpush.bf16.msra.mxu0 %v211
    %223 = vmatpush.bf16.msra.mxu0 %v210
    %224 = vmatpush.bf16.msra.mxu0 %v209
    %225 = vmatpush.bf16.msra.mxu0 %v208
    %226 = vmatpush.bf16.msra.mxu0 %v207
    %227 = vmatpush.bf16.msra.mxu0 %v206
    %228 = vmatpush.bf16.msra.mxu0 %v205
    %229 = vmatmul.bf16.gmra.mxu0 %v155
    %v230 = vpop.f32.mrf.mxu0
    %v231 = vadd.f32 %v172, %v230
    %v232 = vpop.f32.mrf.mxu0
    %233 = vdwg.mxu0
    %vm234 = vcmask 31744
    %235 = vst.msk [vmem:[%s5] sm:$0xff] %vm234, %v231
    // Predicated region
    $region30: #{tpu_custom_call.1} parent=1 // pred_check
      _
    $region31: #{tpu_custom_call.1} parent=1 // pred_check_branch
      %237 = sbr.rel (0) target = $region33
    $region32: #{tpu_custom_call.1} parent=1 // pred_region
      _
    $region33: #{tpu_custom_call.1} parent=1 // pred_fallthru
      _
    // Predicated region
    $region34: #{tpu_custom_call.1} parent=1 // pred_check
      _
    $region35: #{tpu_custom_call.1} parent=1 // pred_check_branch
      %239 = sbr.rel (0) target = $region37
    $region36: #{tpu_custom_call.1} parent=1 // pred_region
      _
    $region37: #{tpu_custom_call.1} parent=1 // pred_fallthru
      _
    %240 = vsyncpa [#allocation3], 1
    %241 = vsyncpa [#allocation5], 1

</llo_original>
